<compile_context>
chip_gen: v6e
topology: v6e:2x2x1
jax: 0.10.0
libtpu: 0.0.40
codegen_flags: <defaults>
</compile_context>

<pallas_src>
import functools
import math

import jax
import jax.numpy as jnp
from jax import lax
from jax.experimental import pallas as pl
from jax.experimental.pallas import tpu as pltpu


def _round_up(x, m):
    return ((x + m - 1) // m) * m


# ----------------------------------------------------------------------------
# Parameter setup (plain-JAX glue): raw params -> per-dim spline tables.
# Batch-independent (softmax / cumsum over num_bins per dim).
# ----------------------------------------------------------------------------
def _make_spline_tables(params, num_bins, tail_bound,
                        min_bin_width, min_bin_height, min_derivative):
    K = num_bins
    left, right = -tail_bound, tail_bound
    bottom, top = -tail_bound, tail_bound

    uw = params[:, :K]                  # (D, K)
    uh = params[:, K:2 * K]             # (D, K)
    ud = params[:, 2 * K:]              # (D, K-1)

    w = jax.nn.softmax(uw, axis=-1)
    w = min_bin_width + (1.0 - min_bin_width * K) * w
    cw = jnp.cumsum(w, axis=-1)
    cw = jnp.pad(cw, ((0, 0), (1, 0)))
    cw = (right - left) * cw + left
    cw = cw.at[:, 0].set(left).at[:, -1].set(right)      # (D, K+1)
    widths = cw[:, 1:] - cw[:, :-1]                      # (D, K)

    h = jax.nn.softmax(uh, axis=-1)
    h = min_bin_height + (1.0 - min_bin_height * K) * h
    ch = jnp.cumsum(h, axis=-1)
    ch = jnp.pad(ch, ((0, 0), (1, 0)))
    ch = (top - bottom) * ch + bottom
    ch = ch.at[:, 0].set(bottom).at[:, -1].set(top)      # (D, K+1)
    heights = ch[:, 1:] - ch[:, :-1]                     # (D, K)

    const = math.log(math.exp(1.0 - min_derivative) - 1.0)
    c = jnp.full((params.shape[0], 1), const, params.dtype)
    derivs = min_derivative + jax.nn.softplus(
        jnp.concatenate([c, ud, c], axis=-1))            # (D, K+1)

    delta = heights / widths                             # (D, K)
    return cw, widths, ch, heights, derivs, delta


# ----------------------------------------------------------------------------
# Pallas kernel: fused bin-search/gather + rational-quadratic evaluation,
# processed slab-by-slab (8-16 sublane rows) to bound vreg live ranges.
#   x_ref:   (TB, L) inputs
#   tbl_ref: (rows_pad, L) stacked tables: cumwidths | cumheights | derivs | delta
# ----------------------------------------------------------------------------
def _rqs_kernel(x_ref, tbl_ref, out_ref, logdet_ref, *,
                num_bins, tail_bound, slab):
    K = num_bins
    left = -tail_bound
    right = tail_bound

    # Row offsets inside the stacked table (rows sit on the sublane axis).
    CW = 0             # cumwidths    rows [0, K]
    CH = K + 1         # cumheights   rows [K+1, 2K+1]
    DV = 2 * (K + 1)   # derivatives  rows [2K+2, 3K+2]
    DL = 3 * (K + 1)   # delta        rows [3K+3, 4K+2]

    def row(i):
        return tbl_ref[i:i + 1, :]        # (1, L), broadcasts against (slab, L)

    n_slabs = x_ref.shape[0] // slab

    def slab_body(s, carry):
        r0 = pl.multiple_of(s * slab, slab)
        x = x_ref[pl.ds(r0, slab), :]                    # (slab, L)
        inside = (x >= left) & (x <= right)
        xc = jnp.clip(x, left, right)

        # Fused bin search + gather.  Edges are strictly increasing, so taking
        # the last k with xc >= cumwidths[k] equals searchsorted+clip+gather.
        # cw[k+1] / d[k+1] are carried to the next iteration (no re-reads).
        cw_hi = row(CW + 1)
        d_hi = row(DV + 1)
        in_cw, in_cwn = row(CW), cw_hi
        in_ch, in_dlt = row(CH), row(DL)
        in_d, in_dp1 = row(DV), d_hi
        for k in range(1, K):
            cw_lo, cw_hi = cw_hi, row(CW + k + 1)
            d_lo, d_hi = d_hi, row(DV + k + 1)
            ch_k = row(CH + k)
            dl_k = row(DL + k)
            ge = xc >= cw_lo
            in_cw = jnp.where(ge, cw_lo, in_cw)
            in_cwn = jnp.where(ge, cw_hi, in_cwn)
            in_ch = jnp.where(ge, ch_k, in_ch)
            in_dlt = jnp.where(ge, dl_k, in_dlt)
            in_d = jnp.where(ge, d_lo, in_d)
            in_dp1 = jnp.where(ge, d_hi, in_dp1)

        # Rational-quadratic evaluation in u = xc - cw[k], v = cw[k+1] - xc.
        # Numerator/denominator are scaled through by w^2 so the only divide
        # is the single shared, exact 1/denominator (f32, keeps 1e-5 tol).
        w = in_cwn - in_cw                # widths[k]
        u = xc - in_cw
        v = in_cwn - xc                   # = w - u
        uv = u * v                        # = theta*(1-theta) * w^2
        h = in_dlt * w                    # heights[k] = delta[k] * widths[k]

        num2 = h * (in_dlt * u * u + in_d * uv)
        den2 = h * w + (in_d + in_dp1 - 2.0 * in_dlt) * uv
        inv_den2 = 1.0 / den2             # exact: logdet tolerance is 1e-5
        spline_out = in_ch + num2 * inv_den2

        dnum = in_dp1 * u * u + 2.0 * in_dlt * uv + in_d * v * v
        hd = h * inv_den2
        spline_ld = jnp.log(dnum * hd * hd)   # = log(deriv_num) - 2*log(den)

        out_ref[pl.ds(r0, slab), :] = jnp.where(inside, spline_out, x)
        logdet_ref[pl.ds(r0, slab), :] = jnp.where(inside, spline_ld, 0.0)
        return carry

    lax.fori_loop(0, n_slabs, slab_body, 0)


# ----------------------------------------------------------------------------
# Wrapper
# ----------------------------------------------------------------------------
def piecewise_rq_forward(inputs, params, *, num_bins=8, tail_bound=3.0,
                         min_bin_width=1e-3, min_bin_height=1e-3,
                         min_derivative=1e-3, batch_tile=None,
                         vmem_budget_bytes=12 << 20):
    """inputs: (B, D) float32, params: (D, 3*num_bins-1) float32."""
    B, D = inputs.shape
    K = num_bins

    cw, _, ch, _, derivs, delta = _make_spline_tables(
        params.astype(jnp.float32), K, tail_bound,
        min_bin_width, min_bin_height, min_derivative)

    # ---- lane-dense layout: always present a 128-multiple lane width --------
    if D >= 128:
        D_pad = _round_up(D, 128)
        r = 1
    else:
        D_pad = 1 << (D - 1).bit_length()      # next power of 2 -> divides 128
        r = 128 // D_pad
    L = r * D_pad

    x = inputs.astype(jnp.float32)
    if D_pad != D:
        x = jnp.pad(x, ((0, 0), (0, D_pad - D)))          # padded lanes discarded
    B_pad = _round_up(B, r)
    if B_pad != B:
        x = jnp.pad(x, ((0, B_pad - B), (0, 0)))          # pad values are benign
    rows = B_pad // r
    x2 = x.reshape(rows, L)       # lane l of x2 carries input dim (l % D_pad)

    # ---- single stacked table: rows = cumwidths | cumheights | derivs | delta
    tbl = jnp.concatenate([cw, ch, derivs, delta], axis=-1).T   # (4K+3, D)
    if D_pad != D:
        # edge-replicate so padded lanes compute finite (discarded) values
        tbl = jnp.pad(tbl, ((0, 0), (0, D_pad - D)), mode="edge")
    n_rows = 4 * K + 3
    n_rows_pad = _round_up(n_rows, 8)
    if n_rows_pad != n_rows:
        tbl = jnp.pad(tbl, ((0, n_rows_pad - n_rows), (0, 0)))
    if r > 1:
        tbl = jnp.tile(tbl, (1, r))   # lane l reads dim (l % D_pad)'s params

    # ---- slab size (bounds in-kernel vreg pressure) --------------------------
    slab = 16 if L <= 128 else 8

    # ---- batch tile sized off a conservative VMEM budget ---------------------
    # 3 f32 streams (x, out, logdet) double-buffered + double-buffered table;
    # kept ~12 MiB so it fits the v5e 16 MiB / v7x 32 MiB scoped-VMEM defaults.
    rows_aligned = _round_up(rows, slab)
    if batch_tile is None:
        tbl_bytes = 2 * n_rows_pad * L * 4
        per_row = 6 * 4 * L
        bt = max(slab, (vmem_budget_bytes - tbl_bytes) // per_row)
        cap = 2048 if L <= 256 else 1024
        batch_tile = min(cap, bt)
    batch_tile = min(batch_tile, rows_aligned)
    if batch_tile >= rows_aligned and rows_aligned >= 2 * slab:
        # keep >= 2 grid steps so the "parallel" axis splits across both
        # TensorCores on v7x (near-free on v5e/v6e).
        batch_tile = rows_aligned // 2
    batch_tile = max(slab, (batch_tile // slab) * slab)

    rows_pad = _round_up(rows, batch_tile)
    if rows_pad != rows:
        x2 = jnp.pad(x2, ((0, rows_pad - rows), (0, 0)))
    grid = (rows_pad // batch_tile,)

    kernel = functools.partial(_rqs_kernel, num_bins=K, tail_bound=tail_bound,
                               slab=slab)
    tile_spec = pl.BlockSpec((batch_tile, L), lambda i: (i, 0))

    out2, ld2 = pl.pallas_call(
        kernel,
        out_shape=(jax.ShapeDtypeStruct((rows_pad, L), jnp.float32),
                   jax.ShapeDtypeStruct((rows_pad, L), jnp.float32)),
        grid=grid,
        in_specs=[
            tile_spec,                                        # x tile
            pl.BlockSpec((n_rows_pad, L), lambda i: (0, 0)),  # stacked tables
        ],
        out_specs=(tile_spec, tile_spec),
        compiler_params=pltpu.CompilerParams(
            dimension_semantics=("parallel",)),
    )(x2, tbl)

    out = out2[:rows].reshape(B_pad, D_pad)[:B, :D]
    logabsdet = ld2[:rows].reshape(B_pad, D_pad)[:B, :D]
    return out, logabsdet


# ----------------------------------------------------------------------------
# Pure-JAX reference (mirrors the PyTorch unconstrained_RQS forward pass)
# ----------------------------------------------------------------------------
def reference_forward(inputs, params, *, num_bins=8, tail_bound=3.0,
                      min_bin_width=1e-3, min_bin_height=1e-3,
                      min_derivative=1e-3):
    K = num_bins
    B = inputs.shape[0]
    cw, widths, ch, heights, derivs, delta = _make_spline_tables(
        params, K, tail_bound, min_bin_width, min_bin_height, min_derivative)

    inside = (inputs >= -tail_bound) & (inputs <= tail_bound)
    xc = jnp.clip(inputs, -tail_bound, tail_bound)

    edges = cw.at[:, -1].add(1e-6)                          # (D, K+1)
    bin_idx = jnp.sum(xc[..., None] >= edges[None], axis=-1) - 1
    bin_idx = jnp.clip(bin_idx, 0, K - 1)                   # (B, D)

    def take(tbl):
        tb = jnp.broadcast_to(tbl[None], (B,) + tbl.shape)
        return jnp.take_along_axis(tb, bin_idx[..., None], axis=-1)[..., 0]

    in_cw = take(cw)
    in_w = take(widths)
    in_ch = take(ch)
    in_h = take(heights)
    in_dlt = take(delta)
    in_d = take(derivs)
    in_dp1 = take(derivs[:, 1:])

    theta = (xc - in_cw) / in_w
    tomt = theta * (1.0 - theta)
    numerator = in_h * (in_dlt * theta ** 2 + in_d * tomt)
    denominator = in_dlt + (in_d + in_dp1 - 2.0 * in_dlt) * tomt
    spline_out = in_ch + numerator / denominator
    deriv_num = in_dlt ** 2 * (in_dp1 * theta ** 2 + 2.0 * in_dlt * tomt
                               + in_d * (1.0 - theta) ** 2)
    spline_ld = jnp.log(deriv_num) - 2.0 * jnp.log(denominator)

    out = jnp.where(inside, spline_out, inputs)
    ld = jnp.where(inside, spline_ld, 0.0)
    return out, ld


if __name__ == "__main__":
    BATCH, DIM, NUM_BINS = 16, 8, 8
    TAIL_BOUND, INIT_SCALE = 3.0, 0.01

    key = jax.random.PRNGKey(0)
    k_params, k_x = jax.random.split(key)

    # deterministic parameter init, same shape as the nn.Parameter in __init__
    params = INIT_SCALE * jax.random.normal(
        k_params, (DIM, 3 * NUM_BINS - 1), dtype=jnp.float32)
    # inputs: some elements fall outside the tail bound (identity branch)
    x = 2.0 * jax.random.normal(k_x, (BATCH, DIM), dtype=jnp.float32)

    out, logdet = piecewise_rq_forward(
        x, params, num_bins=NUM_BINS, tail_bound=TAIL_BOUND)
    out, logdet = jax.block_until_ready((out, logdet))

    ref_out, ref_logdet = reference_forward(
        x, params, num_bins=NUM_BINS, tail_bound=TAIL_BOUND)

    assert out.shape == (BATCH, DIM) and logdet.shape == (BATCH, DIM)
    assert jnp.allclose(out, ref_out, atol=1e-5, rtol=1e-5)
    assert jnp.allclose(logdet, ref_logdet, atol=1e-5, rtol=1e-5)
    print("KERNEL_OK")
</pallas_src>

<mosaic_0001>
module attributes {stable_mosaic.version = 11 : i64} {
  func.func @_rqs_kernel(%arg0: i32, %arg1: memref<16x128xf32, #tpu.memory_space<vmem>>, %arg2: memref<40x128xf32, #tpu.memory_space<vmem>>, %arg3: memref<16x128xf32, #tpu.memory_space<vmem>>, %arg4: memref<16x128xf32, #tpu.memory_space<vmem>>) attributes {dimension_semantics = [#tpu.dimension_semantics<parallel>], iteration_bounds = array<i64: 1>, scalar_prefetch = 0 : i64, scratch_operands = 0 : i64, tpu.core_type = #tpu.core_type<tc>, window_params = [{transform_indices = @transform_0, window_bounds = array<i64: 16, 128>}, {pipeline_mode = #tpu.pipeline_mode<synchronous>, transform_indices = @transform_1, window_bounds = array<i64: 40, 128>}, {transform_indices = @transform_2, window_bounds = array<i64: 16, 128>}, {transform_indices = @transform_3, window_bounds = array<i64: 16, 128>}]} {
    %c0_i32 = arith.constant 0 : i32
    %c16_i32 = arith.constant 16 : i32
    %0 = arith.muli %c0_i32, %c16_i32 : i32
    %1 = tpu.assume_multiple %0, 16 : i32
    %2 = arith.index_cast %1 : i32 to index
    %c0 = arith.constant 0 : index
    %3 = vector.load %arg1[%2, %c0] : memref<16x128xf32, #tpu.memory_space<vmem>>, vector<16x128xf32>
    %cst = arith.constant -3.000000e+00 : f32
    %4 = vector.broadcast %cst : f32 to vector<16x128xf32>
    %5 = arith.cmpf oge, %3, %4 : vector<16x128xf32>
    %cst_0 = arith.constant 3.000000e+00 : f32
    %6 = vector.broadcast %cst_0 : f32 to vector<16x128xf32>
    %7 = arith.cmpf ole, %3, %6 : vector<16x128xf32>
    %8 = arith.andi %5, %7 : vector<16x128xi1>
    %cst_1 = arith.constant -3.000000e+00 : f32
    %cst_2 = arith.constant 3.000000e+00 : f32
    %9 = vector.broadcast %cst_1 : f32 to vector<16x128xf32>
    %10 = arith.maximumf %9, %3 : vector<16x128xf32>
    %11 = vector.broadcast %cst_2 : f32 to vector<16x128xf32>
    %12 = arith.minimumf %11, %10 : vector<16x128xf32>
    %c1 = arith.constant 1 : index
    %c0_3 = arith.constant 0 : index
    %13 = vector.load %arg2[%c1, %c0_3] : memref<40x128xf32, #tpu.memory_space<vmem>>, vector<1x128xf32>
    %c19 = arith.constant 19 : index
    %c0_4 = arith.constant 0 : index
    %14 = vector.load %arg2[%c19, %c0_4] : memref<40x128xf32, #tpu.memory_space<vmem>>, vector<1x128xf32>
    %c0_5 = arith.constant 0 : index
    %c0_6 = arith.constant 0 : index
    %15 = vector.load %arg2[%c0_5, %c0_6] : memref<40x128xf32, #tpu.memory_space<vmem>>, vector<1x128xf32>
    %c9 = arith.constant 9 : index
    %c0_7 = arith.constant 0 : index
    %16 = vector.load %arg2[%c9, %c0_7] : memref<40x128xf32, #tpu.memory_space<vmem>>, vector<1x128xf32>
    %c27 = arith.constant 27 : index
    %c0_8 = arith.constant 0 : index
    %17 = vector.load %arg2[%c27, %c0_8] : memref<40x128xf32, #tpu.memory_space<vmem>>, vector<1x128xf32>
    %c18 = arith.constant 18 : index
    %c0_9 = arith.constant 0 : index
    %18 = vector.load %arg2[%c18, %c0_9] : memref<40x128xf32, #tpu.memory_space<vmem>>, vector<1x128xf32>
    %c2 = arith.constant 2 : index
    %c0_10 = arith.constant 0 : index
    %19 = vector.load %arg2[%c2, %c0_10] : memref<40x128xf32, #tpu.memory_space<vmem>>, vector<1x128xf32>
    %c20 = arith.constant 20 : index
    %c0_11 = arith.constant 0 : index
    %20 = vector.load %arg2[%c20, %c0_11] : memref<40x128xf32, #tpu.memory_space<vmem>>, vector<1x128xf32>
    %c10 = arith.constant 10 : index
    %c0_12 = arith.constant 0 : index
    %21 = vector.load %arg2[%c10, %c0_12] : memref<40x128xf32, #tpu.memory_space<vmem>>, vector<1x128xf32>
    %c28 = arith.constant 28 : index
    %c0_13 = arith.constant 0 : index
    %22 = vector.load %arg2[%c28, %c0_13] : memref<40x128xf32, #tpu.memory_space<vmem>>, vector<1x128xf32>
    %23 = vector.broadcast %13 : vector<1x128xf32> to vector<16x128xf32>
    %24 = arith.cmpf oge, %12, %23 : vector<16x128xf32>
    %25 = vector.shape_cast %13 : vector<1x128xf32> to vector<1x128xf32>
    %26 = vector.broadcast %25 : vector<1x128xf32> to vector<16x128xf32>
    %27 = vector.shape_cast %15 : vector<1x128xf32> to vector<1x128xf32>
    %28 = vector.broadcast %27 : vector<1x128xf32> to vector<16x128xf32>
    %29 = arith.select %24, %26, %28 : vector<16x128xi1>, vector<16x128xf32>
    %30 = vector.shape_cast %19 : vector<1x128xf32> to vector<1x128xf32>
    %31 = vector.broadcast %30 : vector<1x128xf32> to vector<16x128xf32>
    %32 = vector.shape_cast %13 : vector<1x128xf32> to vector<1x128xf32>
    %33 = vector.broadcast %32 : vector<1x128xf32> to vector<16x128xf32>
    %34 = arith.select %24, %31, %33 : vector<16x128xi1>, vector<16x128xf32>
    %35 = vector.shape_cast %21 : vector<1x128xf32> to vector<1x128xf32>
    %36 = vector.broadcast %35 : vector<1x128xf32> to vector<16x128xf32>
    %37 = vector.shape_cast %16 : vector<1x128xf32> to vector<1x128xf32>
    %38 = vector.broadcast %37 : vector<1x128xf32> to vector<16x128xf32>
    %39 = arith.select %24, %36, %38 : vector<16x128xi1>, vector<16x128xf32>
    %40 = vector.shape_cast %22 : vector<1x128xf32> to vector<1x128xf32>
    %41 = vector.broadcast %40 : vector<1x128xf32> to vector<16x128xf32>
    %42 = vector.shape_cast %17 : vector<1x128xf32> to vector<1x128xf32>
    %43 = vector.broadcast %42 : vector<1x128xf32> to vector<16x128xf32>
    %44 = arith.select %24, %41, %43 : vector<16x128xi1>, vector<16x128xf32>
    %45 = vector.shape_cast %14 : vector<1x128xf32> to vector<1x128xf32>
    %46 = vector.broadcast %45 : vector<1x128xf32> to vector<16x128xf32>
    %47 = vector.shape_cast %18 : vector<1x128xf32> to vector<1x128xf32>
    %48 = vector.broadcast %47 : vector<1x128xf32> to vector<16x128xf32>
    %49 = arith.select %24, %46, %48 : vector<16x128xi1>, vector<16x128xf32>
    %50 = vector.shape_cast %20 : vector<1x128xf32> to vector<1x128xf32>
    %51 = vector.broadcast %50 : vector<1x128xf32> to vector<16x128xf32>
    %52 = vector.shape_cast %14 : vector<1x128xf32> to vector<1x128xf32>
    %53 = vector.broadcast %52 : vector<1x128xf32> to vector<16x128xf32>
    %54 = arith.select %24, %51, %53 : vector<16x128xi1>, vector<16x128xf32>
    %c3 = arith.constant 3 : index
    %c0_14 = arith.constant 0 : index
    %55 = vector.load %arg2[%c3, %c0_14] : memref<40x128xf32, #tpu.memory_space<vmem>>, vector<1x128xf32>
    %c21 = arith.constant 21 : index
    %c0_15 = arith.constant 0 : index
    %56 = vector.load %arg2[%c21, %c0_15] : memref<40x128xf32, #tpu.memory_space<vmem>>, vector<1x128xf32>
    %c11 = arith.constant 11 : index
    %c0_16 = arith.constant 0 : index
    %57 = vector.load %arg2[%c11, %c0_16] : memref<40x128xf32, #tpu.memory_space<vmem>>, vector<1x128xf32>
    %c29 = arith.constant 29 : index
    %c0_17 = arith.constant 0 : index
    %58 = vector.load %arg2[%c29, %c0_17] : memref<40x128xf32, #tpu.memory_space<vmem>>, vector<1x128xf32>
    %59 = vector.broadcast %19 : vector<1x128xf32> to vector<16x128xf32>
    %60 = arith.cmpf oge, %12, %59 : vector<16x128xf32>
    %61 = vector.shape_cast %19 : vector<1x128xf32> to vector<1x128xf32>
    %62 = vector.broadcast %61 : vector<1x128xf32> to vector<16x128xf32>
    %63 = arith.select %60, %62, %29 : vector<16x128xi1>, vector<16x128xf32>
    %64 = vector.shape_cast %55 : vector<1x128xf32> to vector<1x128xf32>
    %65 = vector.broadcast %64 : vector<1x128xf32> to vector<16x128xf32>
    %66 = arith.select %60, %65, %34 : vector<16x128xi1>, vector<16x128xf32>
    %67 = vector.shape_cast %57 : vector<1x128xf32> to vector<1x128xf32>
    %68 = vector.broadcast %67 : vector<1x128xf32> to vector<16x128xf32>
    %69 = arith.select %60, %68, %39 : vector<16x128xi1>, vector<16x128xf32>
    %70 = vector.shape_cast %58 : vector<1x128xf32> to vector<1x128xf32>
    %71 = vector.broadcast %70 : vector<1x128xf32> to vector<16x128xf32>
    %72 = arith.select %60, %71, %44 : vector<16x128xi1>, vector<16x128xf32>
    %73 = vector.shape_cast %20 : vector<1x128xf32> to vector<1x128xf32>
    %74 = vector.broadcast %73 : vector<1x128xf32> to vector<16x128xf32>
    %75 = arith.select %60, %74, %49 : vector<16x128xi1>, vector<16x128xf32>
    %76 = vector.shape_cast %56 : vector<1x128xf32> to vector<1x128xf32>
    %77 = vector.broadcast %76 : vector<1x128xf32> to vector<16x128xf32>
    %78 = arith.select %60, %77, %54 : vector<16x128xi1>, vector<16x128xf32>
    %c4 = arith.constant 4 : index
    %c0_18 = arith.constant 0 : index
    %79 = vector.load %arg2[%c4, %c0_18] : memref<40x128xf32, #tpu.memory_space<vmem>>, vector<1x128xf32>
    %c22 = arith.constant 22 : index
    %c0_19 = arith.constant 0 : index
    %80 = vector.load %arg2[%c22, %c0_19] : memref<40x128xf32, #tpu.memory_space<vmem>>, vector<1x128xf32>
    %c12 = arith.constant 12 : index
    %c0_20 = arith.constant 0 : index
    %81 = vector.load %arg2[%c12, %c0_20] : memref<40x128xf32, #tpu.memory_space<vmem>>, vector<1x128xf32>
    %c30 = arith.constant 30 : index
    %c0_21 = arith.constant 0 : index
    %82 = vector.load %arg2[%c30, %c0_21] : memref<40x128xf32, #tpu.memory_space<vmem>>, vector<1x128xf32>
    %83 = vector.broadcast %55 : vector<1x128xf32> to vector<16x128xf32>
    %84 = arith.cmpf oge, %12, %83 : vector<16x128xf32>
    %85 = vector.shape_cast %55 : vector<1x128xf32> to vector<1x128xf32>
    %86 = vector.broadcast %85 : vector<1x128xf32> to vector<16x128xf32>
    %87 = arith.select %84, %86, %63 : vector<16x128xi1>, vector<16x128xf32>
    %88 = vector.shape_cast %79 : vector<1x128xf32> to vector<1x128xf32>
    %89 = vector.broadcast %88 : vector<1x128xf32> to vector<16x128xf32>
    %90 = arith.select %84, %89, %66 : vector<16x128xi1>, vector<16x128xf32>
    %91 = vector.shape_cast %81 : vector<1x128xf32> to vector<1x128xf32>
    %92 = vector.broadcast %91 : vector<1x128xf32> to vector<16x128xf32>
    %93 = arith.select %84, %92, %69 : vector<16x128xi1>, vector<16x128xf32>
    %94 = vector.shape_cast %82 : vector<1x128xf32> to vector<1x128xf32>
    %95 = vector.broadcast %94 : vector<1x128xf32> to vector<16x128xf32>
    %96 = arith.select %84, %95, %72 : vector<16x128xi1>, vector<16x128xf32>
    %97 = vector.shape_cast %56 : vector<1x128xf32> to vector<1x128xf32>
    %98 = vector.broadcast %97 : vector<1x128xf32> to vector<16x128xf32>
    %99 = arith.select %84, %98, %75 : vector<16x128xi1>, vector<16x128xf32>
    %100 = vector.shape_cast %80 : vector<1x128xf32> to vector<1x128xf32>
    %101 = vector.broadcast %100 : vector<1x128xf32> to vector<16x128xf32>
    %102 = arith.select %84, %101, %78 : vector<16x128xi1>, vector<16x128xf32>
    %c5 = arith.constant 5 : index
    %c0_22 = arith.constant 0 : index
    %103 = vector.load %arg2[%c5, %c0_22] : memref<40x128xf32, #tpu.memory_space<vmem>>, vector<1x128xf32>
    %c23 = arith.constant 23 : index
    %c0_23 = arith.constant 0 : index
    %104 = vector.load %arg2[%c23, %c0_23] : memref<40x128xf32, #tpu.memory_space<vmem>>, vector<1x128xf32>
    %c13 = arith.constant 13 : index
    %c0_24 = arith.constant 0 : index
    %105 = vector.load %arg2[%c13, %c0_24] : memref<40x128xf32, #tpu.memory_space<vmem>>, vector<1x128xf32>
    %c31 = arith.constant 31 : index
    %c0_25 = arith.constant 0 : index
    %106 = vector.load %arg2[%c31, %c0_25] : memref<40x128xf32, #tpu.memory_space<vmem>>, vector<1x128xf32>
    %107 = vector.broadcast %79 : vector<1x128xf32> to vector<16x128xf32>
    %108 = arith.cmpf oge, %12, %107 : vector<16x128xf32>
    %109 = vector.shape_cast %79 : vector<1x128xf32> to vector<1x128xf32>
    %110 = vector.broadcast %109 : vector<1x128xf32> to vector<16x128xf32>
    %111 = arith.select %108, %110, %87 : vector<16x128xi1>, vector<16x128xf32>
    %112 = vector.shape_cast %103 : vector<1x128xf32> to vector<1x128xf32>
    %113 = vector.broadcast %112 : vector<1x128xf32> to vector<16x128xf32>
    %114 = arith.select %108, %113, %90 : vector<16x128xi1>, vector<16x128xf32>
    %115 = vector.shape_cast %105 : vector<1x128xf32> to vector<1x128xf32>
    %116 = vector.broadcast %115 : vector<1x128xf32> to vector<16x128xf32>
    %117 = arith.select %108, %116, %93 : vector<16x128xi1>, vector<16x128xf32>
    %118 = vector.shape_cast %106 : vector<1x128xf32> to vector<1x128xf32>
    %119 = vector.broadcast %118 : vector<1x128xf32> to vector<16x128xf32>
    %120 = arith.select %108, %119, %96 : vector<16x128xi1>, vector<16x128xf32>
    %121 = vector.shape_cast %80 : vector<1x128xf32> to vector<1x128xf32>
    %122 = vector.broadcast %121 : vector<1x128xf32> to vector<16x128xf32>
    %123 = arith.select %108, %122, %99 : vector<16x128xi1>, vector<16x128xf32>
    %124 = vector.shape_cast %104 : vector<1x128xf32> to vector<1x128xf32>
    %125 = vector.broadcast %124 : vector<1x128xf32> to vector<16x128xf32>
    %126 = arith.select %108, %125, %102 : vector<16x128xi1>, vector<16x128xf32>
    %c6 = arith.constant 6 : index
    %c0_26 = arith.constant 0 : index
    %127 = vector.load %arg2[%c6, %c0_26] : memref<40x128xf32, #tpu.memory_space<vmem>>, vector<1x128xf32>
    %c24 = arith.constant 24 : index
    %c0_27 = arith.constant 0 : index
    %128 = vector.load %arg2[%c24, %c0_27] : memref<40x128xf32, #tpu.memory_space<vmem>>, vector<1x128xf32>
    %c14 = arith.constant 14 : index
    %c0_28 = arith.constant 0 : index
    %129 = vector.load %arg2[%c14, %c0_28] : memref<40x128xf32, #tpu.memory_space<vmem>>, vector<1x128xf32>
    %c32 = arith.constant 32 : index
    %c0_29 = arith.constant 0 : index
    %130 = vector.load %arg2[%c32, %c0_29] : memref<40x128xf32, #tpu.memory_space<vmem>>, vector<1x128xf32>
    %131 = vector.broadcast %103 : vector<1x128xf32> to vector<16x128xf32>
    %132 = arith.cmpf oge, %12, %131 : vector<16x128xf32>
    %133 = vector.shape_cast %103 : vector<1x128xf32> to vector<1x128xf32>
    %134 = vector.broadcast %133 : vector<1x128xf32> to vector<16x128xf32>
    %135 = arith.select %132, %134, %111 : vector<16x128xi1>, vector<16x128xf32>
    %136 = vector.shape_cast %127 : vector<1x128xf32> to vector<1x128xf32>
    %137 = vector.broadcast %136 : vector<1x128xf32> to vector<16x128xf32>
    %138 = arith.select %132, %137, %114 : vector<16x128xi1>, vector<16x128xf32>
    %139 = vector.shape_cast %129 : vector<1x128xf32> to vector<1x128xf32>
    %140 = vector.broadcast %139 : vector<1x128xf32> to vector<16x128xf32>
    %141 = arith.select %132, %140, %117 : vector<16x128xi1>, vector<16x128xf32>
    %142 = vector.shape_cast %130 : vector<1x128xf32> to vector<1x128xf32>
    %143 = vector.broadcast %142 : vector<1x128xf32> to vector<16x128xf32>
    %144 = arith.select %132, %143, %120 : vector<16x128xi1>, vector<16x128xf32>
    %145 = vector.shape_cast %104 : vector<1x128xf32> to vector<1x128xf32>
    %146 = vector.broadcast %145 : vector<1x128xf32> to vector<16x128xf32>
    %147 = arith.select %132, %146, %123 : vector<16x128xi1>, vector<16x128xf32>
    %148 = vector.shape_cast %128 : vector<1x128xf32> to vector<1x128xf32>
    %149 = vector.broadcast %148 : vector<1x128xf32> to vector<16x128xf32>
    %150 = arith.select %132, %149, %126 : vector<16x128xi1>, vector<16x128xf32>
    %c7 = arith.constant 7 : index
    %c0_30 = arith.constant 0 : index
    %151 = vector.load %arg2[%c7, %c0_30] : memref<40x128xf32, #tpu.memory_space<vmem>>, vector<1x128xf32>
    %c25 = arith.constant 25 : index
    %c0_31 = arith.constant 0 : index
    %152 = vector.load %arg2[%c25, %c0_31] : memref<40x128xf32, #tpu.memory_space<vmem>>, vector<1x128xf32>
    %c15 = arith.constant 15 : index
    %c0_32 = arith.constant 0 : index
    %153 = vector.load %arg2[%c15, %c0_32] : memref<40x128xf32, #tpu.memory_space<vmem>>, vector<1x128xf32>
    %c33 = arith.constant 33 : index
    %c0_33 = arith.constant 0 : index
    %154 = vector.load %arg2[%c33, %c0_33] : memref<40x128xf32, #tpu.memory_space<vmem>>, vector<1x128xf32>
    %155 = vector.broadcast %127 : vector<1x128xf32> to vector<16x128xf32>
    %156 = arith.cmpf oge, %12, %155 : vector<16x128xf32>
    %157 = vector.shape_cast %127 : vector<1x128xf32> to vector<1x128xf32>
    %158 = vector.broadcast %157 : vector<1x128xf32> to vector<16x128xf32>
    %159 = arith.select %156, %158, %135 : vector<16x128xi1>, vector<16x128xf32>
    %160 = vector.shape_cast %151 : vector<1x128xf32> to vector<1x128xf32>
    %161 = vector.broadcast %160 : vector<1x128xf32> to vector<16x128xf32>
    %162 = arith.select %156, %161, %138 : vector<16x128xi1>, vector<16x128xf32>
    %163 = vector.shape_cast %153 : vector<1x128xf32> to vector<1x128xf32>
    %164 = vector.broadcast %163 : vector<1x128xf32> to vector<16x128xf32>
    %165 = arith.select %156, %164, %141 : vector<16x128xi1>, vector<16x128xf32>
    %166 = vector.shape_cast %154 : vector<1x128xf32> to vector<1x128xf32>
    %167 = vector.broadcast %166 : vector<1x128xf32> to vector<16x128xf32>
    %168 = arith.select %156, %167, %144 : vector<16x128xi1>, vector<16x128xf32>
    %169 = vector.shape_cast %128 : vector<1x128xf32> to vector<1x128xf32>
    %170 = vector.broadcast %169 : vector<1x128xf32> to vector<16x128xf32>
    %171 = arith.select %156, %170, %147 : vector<16x128xi1>, vector<16x128xf32>
    %172 = vector.shape_cast %152 : vector<1x128xf32> to vector<1x128xf32>
    %173 = vector.broadcast %172 : vector<1x128xf32> to vector<16x128xf32>
    %174 = arith.select %156, %173, %150 : vector<16x128xi1>, vector<16x128xf32>
    %c8 = arith.constant 8 : index
    %c0_34 = arith.constant 0 : index
    %175 = vector.load %arg2[%c8, %c0_34] : memref<40x128xf32, #tpu.memory_space<vmem>>, vector<1x128xf32>
    %c26 = arith.constant 26 : index
    %c0_35 = arith.constant 0 : index
    %176 = vector.load %arg2[%c26, %c0_35] : memref<40x128xf32, #tpu.memory_space<vmem>>, vector<1x128xf32>
    %c16 = arith.constant 16 : index
    %c0_36 = arith.constant 0 : index
    %177 = vector.load %arg2[%c16, %c0_36] : memref<40x128xf32, #tpu.memory_space<vmem>>, vector<1x128xf32>
    %c34 = arith.constant 34 : index
    %c0_37 = arith.constant 0 : index
    %178 = vector.load %arg2[%c34, %c0_37] : memref<40x128xf32, #tpu.memory_space<vmem>>, vector<1x128xf32>
    %179 = vector.broadcast %151 : vector<1x128xf32> to vector<16x128xf32>
    %180 = arith.cmpf oge, %12, %179 : vector<16x128xf32>
    %181 = vector.shape_cast %151 : vector<1x128xf32> to vector<1x128xf32>
    %182 = vector.broadcast %181 : vector<1x128xf32> to vector<16x128xf32>
    %183 = arith.select %180, %182, %159 : vector<16x128xi1>, vector<16x128xf32>
    %184 = vector.shape_cast %175 : vector<1x128xf32> to vector<1x128xf32>
    %185 = vector.broadcast %184 : vector<1x128xf32> to vector<16x128xf32>
    %186 = arith.select %180, %185, %162 : vector<16x128xi1>, vector<16x128xf32>
    %187 = vector.shape_cast %177 : vector<1x128xf32> to vector<1x128xf32>
    %188 = vector.broadcast %187 : vector<1x128xf32> to vector<16x128xf32>
    %189 = arith.select %180, %188, %165 : vector<16x128xi1>, vector<16x128xf32>
    %190 = vector.shape_cast %178 : vector<1x128xf32> to vector<1x128xf32>
    %191 = vector.broadcast %190 : vector<1x128xf32> to vector<16x128xf32>
    %192 = arith.select %180, %191, %168 : vector<16x128xi1>, vector<16x128xf32>
    %193 = vector.shape_cast %152 : vector<1x128xf32> to vector<1x128xf32>
    %194 = vector.broadcast %193 : vector<1x128xf32> to vector<16x128xf32>
    %195 = arith.select %180, %194, %171 : vector<16x128xi1>, vector<16x128xf32>
    %196 = vector.shape_cast %176 : vector<1x128xf32> to vector<1x128xf32>
    %197 = vector.broadcast %196 : vector<1x128xf32> to vector<16x128xf32>
    %198 = arith.select %180, %197, %174 : vector<16x128xi1>, vector<16x128xf32>
    %199 = arith.subf %186, %183 : vector<16x128xf32>
    %200 = arith.subf %12, %183 : vector<16x128xf32>
    %201 = arith.subf %186, %12 : vector<16x128xf32>
    %202 = arith.mulf %200, %201 : vector<16x128xf32>
    %203 = arith.mulf %192, %199 : vector<16x128xf32>
    %204 = arith.mulf %192, %200 : vector<16x128xf32>
    %205 = arith.mulf %204, %200 : vector<16x128xf32>
    %206 = arith.mulf %195, %202 : vector<16x128xf32>
    %207 = arith.addf %205, %206 : vector<16x128xf32>
    %208 = arith.mulf %203, %207 : vector<16x128xf32>
    %209 = arith.mulf %203, %199 : vector<16x128xf32>
    %210 = arith.addf %195, %198 : vector<16x128xf32>
    %cst_38 = arith.constant 2.000000e+00 : f32
    %211 = vector.broadcast %cst_38 : f32 to vector<16x128xf32>
    %212 = arith.mulf %211, %192 : vector<16x128xf32>
    %213 = arith.subf %210, %212 : vector<16x128xf32>
    %214 = arith.mulf %213, %202 : vector<16x128xf32>
    %215 = arith.addf %209, %214 : vector<16x128xf32>
    %cst_39 = arith.constant 1.000000e+00 : f32
    %216 = vector.broadcast %cst_39 : f32 to vector<16x128xf32>
    %217 = arith.divf %216, %215 : vector<16x128xf32>
    %218 = arith.mulf %208, %217 : vector<16x128xf32>
    %219 = arith.addf %189, %218 : vector<16x128xf32>
    %220 = arith.mulf %198, %200 : vector<16x128xf32>
    %221 = arith.mulf %220, %200 : vector<16x128xf32>
    %cst_40 = arith.constant 2.000000e+00 : f32
    %222 = vector.broadcast %cst_40 : f32 to vector<16x128xf32>
    %223 = arith.mulf %222, %192 : vector<16x128xf32>
    %224 = arith.mulf %223, %202 : vector<16x128xf32>
    %225 = arith.addf %221, %224 : vector<16x128xf32>
    %226 = arith.mulf %195, %201 : vector<16x128xf32>
    %227 = arith.mulf %226, %201 : vector<16x128xf32>
    %228 = arith.addf %225, %227 : vector<16x128xf32>
    %229 = arith.mulf %203, %217 : vector<16x128xf32>
    %230 = arith.mulf %228, %229 : vector<16x128xf32>
    %231 = arith.mulf %230, %229 : vector<16x128xf32>
    %232 = math.log %231 : vector<16x128xf32>
    %233 = arith.select %8, %219, %3 : vector<16x128xi1>, vector<16x128xf32>
    %234 = arith.index_cast %1 : i32 to index
    %c0_41 = arith.constant 0 : index
    %235 = vector.load %arg3[%234, %c0_41] : memref<16x128xf32, #tpu.memory_space<vmem>>, vector<16x128xf32>
    tpu.vector_store %arg3[%234, %c0_41], %233 {strides = array<i32>} : memref<16x128xf32, #tpu.memory_space<vmem>>, vector<16x128xf32>,
    %cst_42 = arith.constant 0.000000e+00 : f32
    %236 = vector.broadcast %cst_42 : f32 to vector<16x128xf32>
    %237 = arith.select %8, %232, %236 : vector<16x128xi1>, vector<16x128xf32>
    %238 = arith.index_cast %1 : i32 to index
    %c0_43 = arith.constant 0 : index
    %239 = vector.load %arg4[%238, %c0_43] : memref<16x128xf32, #tpu.memory_space<vmem>>, vector<16x128xf32>
    tpu.vector_store %arg4[%238, %c0_43], %237 {strides = array<i32>} : memref<16x128xf32, #tpu.memory_space<vmem>>, vector<16x128xf32>,
    %c1_i32 = arith.constant 1 : i32
    return
  }
  func.func @transform_0(%arg0: i32) -> (i32, i32) {
    %c0_i32 = arith.constant 0 : i32
    %c0_i32_0 = arith.constant 0 : i32
    return %arg0, %c0_i32 : i32, i32
  }
  func.func @transform_1(%arg0: i32) -> (i32, i32) {
    %c0_i32 = arith.constant 0 : i32
    %c0_i32_0 = arith.constant 0 : i32
    %c0_i32_1 = arith.constant 0 : i32
    return %c0_i32, %c0_i32_0 : i32, i32
  }
  func.func @transform_2(%arg0: i32) -> (i32, i32) {
    %c0_i32 = arith.constant 0 : i32
    %c0_i32_0 = arith.constant 0 : i32
    return %arg0, %c0_i32 : i32, i32
  }
  func.func @transform_3(%arg0: i32) -> (i32, i32) {
    %c0_i32 = arith.constant 0 : i32
    %c0_i32_0 = arith.constant 0 : i32
    return %arg0, %c0_i32 : i32, i32
  }
}

</mosaic_0001>

<llo_original>
// kernel: tpu_custom_call.1
$region0: #{tpu_custom_call.1}
  #allocation0 [shape = 'u32[]', space=smem, size = 0x4, offset = 0x4, fixed_abs, tag = 'smem constant byte address 0x4 - core index']
  #allocation1 [shape = 'u32[144,128]{1,0:T(1,128)}', space=vmem, size = 0x12000, scoped, tag = 'internal scratch']
  %s0 = inlined_call_operand.hbm [shape: f32[16,128], index: 0, kind: input, shape index: {}]
  %s1 = inlined_call_operand.hbm [shape: f32[40,128], index: 1, kind: input, shape index: {}]
  %s2 = inlined_call_operand.hbm [shape: f32[16,128], index: 2, kind: output, shape index: {0}]
  %s3 = inlined_call_operand.hbm [shape: f32[16,128], index: 3, kind: output, shape index: {1}]
  %4 = xla_tuple %s2, %s3
  %s5 = sld [smem:[#allocation0]]
  $region34: #{tpu_custom_call.1} parent=0
    _
  %s7 = ssub.s32 1, %s5
  %s8 = scalar_select 0, %s7, %s5
  $region1: #{tpu_custom_call.1} parent=0
    #allocation2 [shape = 'u8[8192]{0}', space=vmem, size = 0x2000, scoped, tag = 'input window, operand 0, single buffered']
    #allocation3 [shape = 's32[1]{0}', space=sflag, size = 0x4, scoped, tag = 'scoped memory for tpu_custom_call.1']
    #allocation4 [shape = 's32[1]{0}', space=sflag, size = 0x4, scoped, tag = 'scoped memory for tpu_custom_call.1']
    #allocation5 [shape = 'u8[20480]{0}', space=vmem, size = 0x5000, scoped, tag = 'input window, operand 1, single buffered']
    #allocation6 [shape = 's32[1]{0}', space=sflag, size = 0x4, scoped, tag = 'scoped memory for tpu_custom_call.1']
    #allocation7 [shape = 'u8[8192]{0}', space=vmem, size = 0x2000, scoped, tag = 'output window, operand 0, single buffered']
    #allocation8 [shape = 'u8[8192]{0}', space=vmem, size = 0x2000, scoped, tag = 'output window, operand 1, single buffered']
    #allocation9 [shape = 's32[1]{0}', space=sflag, size = 0x4, scoped, tag = 'scoped memory for tpu_custom_call.1']
    %9 = vsyncpa [#allocation3], 0
    %10 = vsyncpa [#allocation6], 0
    %11 = vsyncpa [#allocation4], 0
    %12 = vsyncpa [#allocation9], 0
    // Predicated region
    $region2: #{tpu_custom_call.1} parent=1 // pred_check
      _
    $region3: #{tpu_custom_call.1} parent=1 // pred_check_branch
      %14 = sbr.rel (0) target = $region5
    $region4: #{tpu_custom_call.1} parent=1 // pred_region
      %s16 = ssub.s32 256, 256
      %17 = vsyncadd [#allocation3], %s16
      %s18 = sshll.u32 [#allocation2], 4
      %s19 = int_to_ptr.vmem [resolvable:$true] %s18
      %24 = dma.hbm_to_vmem [thread:$0]  %s0, 256, %s19, [#allocation3], 128, 128, 8
    $region5: #{tpu_custom_call.1} parent=1 // pred_fallthru
      _
    // Predicated region
    $region6: #{tpu_custom_call.1} parent=1 // pred_check
      _
    $region7: #{tpu_custom_call.1} parent=1 // pred_check_branch
      %26 = sbr.rel (0) target = $region9
    $region8: #{tpu_custom_call.1} parent=1 // pred_region
      %s28 = ssub.s32 640, 640
      %29 = vsyncadd [#allocation6], %s28
      %s30 = sshll.u32 [#allocation5], 4
      %s31 = int_to_ptr.vmem [resolvable:$true] %s30
      %36 = dma.hbm_to_vmem [thread:$0]  %s1, 640, %s31, [#allocation6], 128, 128, 8
    $region9: #{tpu_custom_call.1} parent=1 // pred_fallthru
      _
    // Predicated region
    $region10: #{tpu_custom_call.1} parent=1 // pred_check
      _
    $region11: #{tpu_custom_call.1} parent=1 // pred_check_branch
      %38 = sbr.rel (0) target = $region13
    $region12: #{tpu_custom_call.1} parent=1 // pred_region
      %39 = dma.done [#allocation3], 256
    $region13: #{tpu_custom_call.1} parent=1 // pred_fallthru
      _
    // Predicated region
    $region14: #{tpu_custom_call.1} parent=1 // pred_check
      _
    $region15: #{tpu_custom_call.1} parent=1 // pred_check_branch
      %41 = sbr.rel (0) target = $region17
    $region16: #{tpu_custom_call.1} parent=1 // pred_region
      %42 = dma.done [#allocation6], 640
    $region17: #{tpu_custom_call.1} parent=1 // pred_fallthru
      _
    %v43 = vld [vmem:[#allocation2] sm:$0xff]
    %v44 = vld [vmem:[#allocation2 + $0x8] sm:$0xff]
    %vm45 = vcmp.ge.f32.partialorder %v43, -3.0
    %vm46 = vcmp.ge.f32.partialorder %v44, -3.0
    %vm47 = vcmp.le.f32.partialorder %v43, 3.0
    %vm48 = vcmp.le.f32.partialorder %v44, 3.0
    %vm49 = vmand %vm45, %vm47
    %vm50 = vmand %vm46, %vm48
    %v51 = vmax.f32 %v43, -3.0
    %v52 = vmax.f32 %v44, -3.0
    %v53 = vmin.f32 %v51, 3.0
    %v54 = vmin.f32 %v52, 3.0
    %v55 = vld [vmem:[#allocation5 + $0x1] sm:$0x1]
    %v56 = vld [vmem:[#allocation5 + $0x13] sm:$0x1]
    %v57 = vld [vmem:[#allocation5] sm:$0x1]
    %v58 = vld [vmem:[#allocation5 + $0x9] sm:$0x1]
    %v59 = vld [vmem:[#allocation5 + $0x1b] sm:$0x1]
    %v60 = vld [vmem:[#allocation5 + $0x12] sm:$0x1]
    %v61 = vld [vmem:[#allocation5 + $0x2] sm:$0x1]
    %v62 = vld [vmem:[#allocation5 + $0x14] sm:$0x1]
    %v63 = vld [vmem:[#allocation5 + $0xa] sm:$0x1]
    %v64 = vld [vmem:[#allocation5 + $0x1c] sm:$0x1]
    %v65 = vlaneseq
    %v66 = vshrl.u32 %v65, 7
    %v67 = vsub.s32 0, %v66
    %v68 = vrot.slane %v55, %v67
    %vm69 = vcmp.ge.f32.partialorder %v53, %v68
    %vm70 = vcmp.ge.f32.partialorder %v54, %v68
    %v71 = vlaneseq
    %v72 = vshrl.u32 %v71, 7
    %v73 = vsub.s32 0, %v72
    %v74 = vrot.slane %v57, %v73
    %v75 = vsel %vm69, %v68, %v74
    %v76 = vsel %vm70, %v68, %v74
    %v77 = vlaneseq
    %v78 = vshrl.u32 %v77, 7
    %v79 = vsub.s32 0, %v78
    %v80 = vrot.slane %v61, %v79
    %v81 = vsel %vm69, %v80, %v68
    %v82 = vsel %vm70, %v80, %v68
    %v83 = vlaneseq
    %v84 = vshrl.u32 %v83, 7
    %v85 = vsub.s32 0, %v84
    %v86 = vrot.slane %v63, %v85
    %v87 = vlaneseq
    %v88 = vshrl.u32 %v87, 7
    %v89 = vsub.s32 0, %v88
    %v90 = vrot.slane %v58, %v89
    %v91 = vsel %vm69, %v86, %v90
    %v92 = vsel %vm70, %v86, %v90
    %v93 = vlaneseq
    %v94 = vshrl.u32 %v93, 7
    %v95 = vsub.s32 0, %v94
    %v96 = vrot.slane %v64, %v95
    %v97 = vlaneseq
    %v98 = vshrl.u32 %v97, 7
    %v99 = vsub.s32 0, %v98
    %v100 = vrot.slane %v59, %v99
    %v101 = vsel %vm69, %v96, %v100
    %v102 = vsel %vm70, %v96, %v100
    %v103 = vlaneseq
    %v104 = vshrl.u32 %v103, 7
    %v105 = vsub.s32 0, %v104
    %v106 = vrot.slane %v56, %v105
    %v107 = vlaneseq
    %v108 = vshrl.u32 %v107, 7
    %v109 = vsub.s32 0, %v108
    %v110 = vrot.slane %v60, %v109
    %v111 = vsel %vm69, %v106, %v110
    %v112 = vsel %vm70, %v106, %v110
    %v113 = vlaneseq
    %v114 = vshrl.u32 %v113, 7
    %v115 = vsub.s32 0, %v114
    %v116 = vrot.slane %v62, %v115
    %v117 = vsel %vm69, %v116, %v106
    %v118 = vsel %vm70, %v116, %v106
    %v119 = vld [vmem:[#allocation5 + $0x3] sm:$0x1]
    %v120 = vld [vmem:[#allocation5 + $0x15] sm:$0x1]
    %v121 = vld [vmem:[#allocation5 + $0xb] sm:$0x1]
    %v122 = vld [vmem:[#allocation5 + $0x1d] sm:$0x1]
    %vm123 = vcmp.ge.f32.partialorder %v53, %v80
    %vm124 = vcmp.ge.f32.partialorder %v54, %v80
    %v125 = vsel %vm123, %v80, %v75
    %v126 = vsel %vm124, %v80, %v76
    %v127 = vlaneseq
    %v128 = vshrl.u32 %v127, 7
    %v129 = vsub.s32 0, %v128
    %v130 = vrot.slane %v119, %v129
    %v131 = vsel %vm123, %v130, %v81
    %v132 = vsel %vm124, %v130, %v82
    %v133 = vlaneseq
    %v134 = vshrl.u32 %v133, 7
    %v135 = vsub.s32 0, %v134
    %v136 = vrot.slane %v121, %v135
    %v137 = vsel %vm123, %v136, %v91
    %v138 = vsel %vm124, %v136, %v92
    %v139 = vlaneseq
    %v140 = vshrl.u32 %v139, 7
    %v141 = vsub.s32 0, %v140
    %v142 = vrot.slane %v122, %v141
    %v143 = vsel %vm123, %v142, %v101
    %v144 = vsel %vm124, %v142, %v102
    %v145 = vsel %vm123, %v116, %v111
    %v146 = vsel %vm124, %v116, %v112
    %v147 = vlaneseq
    %v148 = vshrl.u32 %v147, 7
    %v149 = vsub.s32 0, %v148
    %v150 = vrot.slane %v120, %v149
    %v151 = vsel %vm123, %v150, %v117
    %v152 = vsel %vm124, %v150, %v118
    %v153 = vld [vmem:[#allocation5 + $0x4] sm:$0x1]
    %v154 = vld [vmem:[#allocation5 + $0x16] sm:$0x1]
    %v155 = vld [vmem:[#allocation5 + $0xc] sm:$0x1]
    %v156 = vld [vmem:[#allocation5 + $0x1e] sm:$0x1]
    %vm157 = vcmp.ge.f32.partialorder %v53, %v130
    %vm158 = vcmp.ge.f32.partialorder %v54, %v130
    %v159 = vsel %vm157, %v130, %v125
    %v160 = vsel %vm158, %v130, %v126
    %v161 = vlaneseq
    %v162 = vshrl.u32 %v161, 7
    %v163 = vsub.s32 0, %v162
    %v164 = vrot.slane %v153, %v163
    %v165 = vsel %vm157, %v164, %v131
    %v166 = vsel %vm158, %v164, %v132
    %v167 = vlaneseq
    %v168 = vshrl.u32 %v167, 7
    %v169 = vsub.s32 0, %v168
    %v170 = vrot.slane %v155, %v169
    %v171 = vsel %vm157, %v170, %v137
    %v172 = vsel %vm158, %v170, %v138
    %v173 = vlaneseq
    %v174 = vshrl.u32 %v173, 7
    %v175 = vsub.s32 0, %v174
    %v176 = vrot.slane %v156, %v175
    %v177 = vsel %vm157, %v176, %v143
    %v178 = vsel %vm158, %v176, %v144
    %v179 = vsel %vm157, %v150, %v145
    %v180 = vsel %vm158, %v150, %v146
    %v181 = vlaneseq
    %v182 = vshrl.u32 %v181, 7
    %v183 = vsub.s32 0, %v182
    %v184 = vrot.slane %v154, %v183
    %v185 = vsel %vm157, %v184, %v151
    %v186 = vsel %vm158, %v184, %v152
    %v187 = vld [vmem:[#allocation5 + $0x5] sm:$0x1]
    %v188 = vld [vmem:[#allocation5 + $0x17] sm:$0x1]
    %v189 = vld [vmem:[#allocation5 + $0xd] sm:$0x1]
    %v190 = vld [vmem:[#allocation5 + $0x1f] sm:$0x1]
    %vm191 = vcmp.ge.f32.partialorder %v53, %v164
    %vm192 = vcmp.ge.f32.partialorder %v54, %v164
    %v193 = vsel %vm191, %v164, %v159
    %v194 = vsel %vm192, %v164, %v160
    %v195 = vlaneseq
    %v196 = vshrl.u32 %v195, 7
    %v197 = vsub.s32 0, %v196
    %v198 = vrot.slane %v187, %v197
    %v199 = vsel %vm191, %v198, %v165
    %v200 = vsel %vm192, %v198, %v166
    %v201 = vlaneseq
    %v202 = vshrl.u32 %v201, 7
    %v203 = vsub.s32 0, %v202
    %v204 = vrot.slane %v189, %v203
    %v205 = vsel %vm191, %v204, %v171
    %v206 = vsel %vm192, %v204, %v172
    %v207 = vlaneseq
    %v208 = vshrl.u32 %v207, 7
    %v209 = vsub.s32 0, %v208
    %v210 = vrot.slane %v190, %v209
    %v211 = vsel %vm191, %v210, %v177
    %v212 = vsel %vm192, %v210, %v178
    %v213 = vsel %vm191, %v184, %v179
    %v214 = vsel %vm192, %v184, %v180
    %v215 = vlaneseq
    %v216 = vshrl.u32 %v215, 7
    %v217 = vsub.s32 0, %v216
    %v218 = vrot.slane %v188, %v217
    %v219 = vsel %vm191, %v218, %v185
    %v220 = vsel %vm192, %v218, %v186
    %v221 = vld [vmem:[#allocation5 + $0x6] sm:$0x1]
    %v222 = vld [vmem:[#allocation5 + $0x18] sm:$0x1]
    %v223 = vld [vmem:[#allocation5 + $0xe] sm:$0x1]
    %v224 = vld [vmem:[#allocation5 + $0x20] sm:$0x1]
    %vm225 = vcmp.ge.f32.partialorder %v53, %v198
    %vm226 = vcmp.ge.f32.partialorder %v54, %v198
    %v227 = vsel %vm225, %v198, %v193
    %v228 = vsel %vm226, %v198, %v194
    %v229 = vlaneseq
    %v230 = vshrl.u32 %v229, 7
    %v231 = vsub.s32 0, %v230
    %v232 = vrot.slane %v221, %v231
    %v233 = vsel %vm225, %v232, %v199
    %v234 = vsel %vm226, %v232, %v200
    %v235 = vlaneseq
    %v236 = vshrl.u32 %v235, 7
    %v237 = vsub.s32 0, %v236
    %v238 = vrot.slane %v223, %v237
    %v239 = vsel %vm225, %v238, %v205
    %v240 = vsel %vm226, %v238, %v206
    %v241 = vlaneseq
    %v242 = vshrl.u32 %v241, 7
    %v243 = vsub.s32 0, %v242
    %v244 = vrot.slane %v224, %v243
    %v245 = vsel %vm225, %v244, %v211
    %v246 = vsel %vm226, %v244, %v212
    %v247 = vsel %vm225, %v218, %v213
    %v248 = vsel %vm226, %v218, %v214
    %v249 = vlaneseq
    %v250 = vshrl.u32 %v249, 7
    %v251 = vsub.s32 0, %v250
    %v252 = vrot.slane %v222, %v251
    %v253 = vsel %vm225, %v252, %v219
    %v254 = vsel %vm226, %v252, %v220
    %v255 = vld [vmem:[#allocation5 + $0x7] sm:$0x1]
    %v256 = vld [vmem:[#allocation5 + $0x19] sm:$0x1]
    %v257 = vld [vmem:[#allocation5 + $0xf] sm:$0x1]
    %v258 = vld [vmem:[#allocation5 + $0x21] sm:$0x1]
    %vm259 = vcmp.ge.f32.partialorder %v53, %v232
    %vm260 = vcmp.ge.f32.partialorder %v54, %v232
    %v261 = vsel %vm259, %v232, %v227
    %v262 = vsel %vm260, %v232, %v228
    %v263 = vlaneseq
    %v264 = vshrl.u32 %v263, 7
    %v265 = vsub.s32 0, %v264
    %v266 = vrot.slane %v255, %v265
    %v267 = vsel %vm259, %v266, %v233
    %v268 = vsel %vm260, %v266, %v234
    %v269 = vlaneseq
    %v270 = vshrl.u32 %v269, 7
    %v271 = vsub.s32 0, %v270
    %v272 = vrot.slane %v257, %v271
    %v273 = vsel %vm259, %v272, %v239
    %v274 = vsel %vm260, %v272, %v240
    %v275 = vlaneseq
    %v276 = vshrl.u32 %v275, 7
    %v277 = vsub.s32 0, %v276
    %v278 = vrot.slane %v258, %v277
    %v279 = vsel %vm259, %v278, %v245
    %v280 = vsel %vm260, %v278, %v246
    %v281 = vsel %vm259, %v252, %v247
    %v282 = vsel %vm260, %v252, %v248
    %v283 = vlaneseq
    %v284 = vshrl.u32 %v283, 7
    %v285 = vsub.s32 0, %v284
    %v286 = vrot.slane %v256, %v285
    %v287 = vsel %vm259, %v286, %v253
    %v288 = vsel %vm260, %v286, %v254
    %v289 = vld [vmem:[#allocation5 + $0x8] sm:$0x1]
    %v290 = vld [vmem:[#allocation5 + $0x1a] sm:$0x1]
    %v291 = vld [vmem:[#allocation5 + $0x10] sm:$0x1]
    %v292 = vld [vmem:[#allocation5 + $0x22] sm:$0x1]
    %vm293 = vcmp.ge.f32.partialorder %v53, %v266
    %vm294 = vcmp.ge.f32.partialorder %v54, %v266
    %v295 = vsel %vm293, %v266, %v261
    %v296 = vsel %vm294, %v266, %v262
    %v297 = vlaneseq
    %v298 = vshrl.u32 %v297, 7
    %v299 = vsub.s32 0, %v298
    %v300 = vrot.slane %v289, %v299
    %v301 = vsel %vm293, %v300, %v267
    %v302 = vsel %vm294, %v300, %v268
    %v303 = vlaneseq
    %v304 = vshrl.u32 %v303, 7
    %v305 = vsub.s32 0, %v304
    %v306 = vrot.slane %v291, %v305
    %v307 = vsel %vm293, %v306, %v273
    %v308 = vsel %vm294, %v306, %v274
    %v309 = vlaneseq
    %v310 = vshrl.u32 %v309, 7
    %v311 = vsub.s32 0, %v310
    %v312 = vrot.slane %v292, %v311
    %v313 = vsel %vm293, %v312, %v279
    %v314 = vsel %vm294, %v312, %v280
    %v315 = vsel %vm293, %v286, %v281
    %v316 = vsel %vm294, %v286, %v282
    %v317 = vlaneseq
    %v318 = vshrl.u32 %v317, 7
    %v319 = vsub.s32 0, %v318
    %v320 = vrot.slane %v290, %v319
    %v321 = vsel %vm293, %v320, %v287
    %v322 = vsel %vm294, %v320, %v288
    %v323 = vsub.f32 %v301, %v295
    %v324 = vsub.f32 %v302, %v296
    %v325 = vsub.f32 %v53, %v295
    %v326 = vsub.f32 %v54, %v296
    %v327 = vsub.f32 %v301, %v53
    %v328 = vsub.f32 %v302, %v54
    %v329 = vmul.f32 %v325, %v327
    %v330 = vmul.f32 %v326, %v328
    %v331 = vmul.f32 %v313, %v323
    %v332 = vmul.f32 %v314, %v324
    %v333 = vmul.f32 %v313, %v325
    %v334 = vmul.f32 %v314, %v326
    %v335 = vmul.f32 %v333, %v325
    %v336 = vmul.f32 %v334, %v326
    %v337 = vmul.f32 %v315, %v329
    %v338 = vmul.f32 %v316, %v330
    %v339 = vadd.f32 %v335, %v337
    %v340 = vadd.f32 %v336, %v338
    %v341 = vmul.f32 %v331, %v339
    %v342 = vmul.f32 %v332, %v340
    %v343 = vmul.f32 %v331, %v323
    %v344 = vmul.f32 %v332, %v324
    %v345 = vadd.f32 %v315, %v321
    %v346 = vadd.f32 %v316, %v322
    %v347 = vmul.f32 %v313, 2.0
    %v348 = vmul.f32 %v314, 2.0
    %v349 = vsub.f32 %v345, %v347
    %v350 = vsub.f32 %v346, %v348
    %v351 = vmul.f32 %v349, %v329
    %v352 = vmul.f32 %v350, %v330
    %v353 = vadd.f32 %v343, %v351
    %v354 = vadd.f32 %v344, %v352
    %v355 = vrcp.pop %v353
    %v356 = vmul.f32 1.0, %v355
    %v357 = vrcp.pop %v354
    %v358 = vmul.f32 1.0, %v357
    %v359 = vmul.f32 %v341, %v356
    %v360 = vmul.f32 %v342, %v358
    %v361 = vadd.f32 %v307, %v359
    %v362 = vadd.f32 %v308, %v360
    %v363 = vmul.f32 %v321, %v325
    %v364 = vmul.f32 %v322, %v326
    %v365 = vmul.f32 %v363, %v325
    %v366 = vmul.f32 %v364, %v326
    %v367 = vmul.f32 %v347, %v329
    %v368 = vmul.f32 %v348, %v330
    %v369 = vadd.f32 %v365, %v367
    %v370 = vadd.f32 %v366, %v368
    %v371 = vmul.f32 %v315, %v327
    %v372 = vmul.f32 %v316, %v328
    %v373 = vmul.f32 %v371, %v327
    %v374 = vmul.f32 %v372, %v328
    %v375 = vadd.f32 %v369, %v373
    %v376 = vadd.f32 %v370, %v374
    %v377 = vmul.f32 %v331, %v356
    %v378 = vmul.f32 %v332, %v358
    %v379 = vmul.f32 %v375, %v377
    %v380 = vmul.f32 %v376, %v378
    %v381 = vmul.f32 %v379, %v377
    %v382 = vmul.f32 %v380, %v378
    %v383 = vlog2.pop %v381
    %v384 = vmul.f32 %v383, 0.6931472
    %v385 = vlog2.pop %v382
    %v386 = vmul.f32 %v385, 0.6931472
    %v387 = vsel %vm49, %v361, %v43
    %v388 = vsel %vm50, %v362, %v44
    %389 = vst [vmem:[#allocation7] sm:$0xff] %v387
    %390 = vst [vmem:[#allocation7 + $0x8] sm:$0xff] %v388
    %v391 = vsel %vm49, %v384, 0.0
    %v392 = vsel %vm50, %v386, 0.0
    %393 = vst [vmem:[#allocation8] sm:$0xff] %v391
    %394 = vst [vmem:[#allocation8 + $0x8] sm:$0xff] %v392
    // Predicated region
    $region18: #{tpu_custom_call.1} parent=1 // pred_check
      _
    $region19: #{tpu_custom_call.1} parent=1 // pred_check_branch
      %396 = sbr.rel (0) target = $region21
    $region20: #{tpu_custom_call.1} parent=1 // pred_region
      %s398 = ssub.s32 256, 256
      %399 = vsyncadd [#allocation4], %s398
      %s400 = sshll.u32 [#allocation7], 4
      %s401 = int_to_ptr.vmem [resolvable:$true] %s400
      %406 = dma.vmem_to_hbm [thread:$0]  %s401, 256, %s2, [#allocation4], 128, 128, 8
    $region21: #{tpu_custom_call.1} parent=1 // pred_fallthru
      _
    // Predicated region
    $region22: #{tpu_custom_call.1} parent=1 // pred_check
      _
    $region23: #{tpu_custom_call.1} parent=1 // pred_check_branch
      %408 = sbr.rel (0) target = $region25
    $region24: #{tpu_custom_call.1} parent=1 // pred_region
      %s410 = ssub.s32 256, 256
      %411 = vsyncadd [#allocation9], %s410
      %s412 = sshll.u32 [#allocation8], 4
      %s413 = int_to_ptr.vmem [resolvable:$true] %s412
      %418 = dma.vmem_to_hbm [thread:$0]  %s413, 256, %s3, [#allocation9], 128, 128, 8
    $region25: #{tpu_custom_call.1} parent=1 // pred_fallthru
      _
    // Predicated region
    $region26: #{tpu_custom_call.1} parent=1 // pred_check
      _
    $region27: #{tpu_custom_call.1} parent=1 // pred_check_branch
      %420 = sbr.rel (0) target = $region29
    $region28: #{tpu_custom_call.1} parent=1 // pred_region
      %421 = dma.done [#allocation4], 256
    $region29: #{tpu_custom_call.1} parent=1 // pred_fallthru
      _
    // Predicated region
    $region30: #{tpu_custom_call.1} parent=1 // pred_check
      _
    $region31: #{tpu_custom_call.1} parent=1 // pred_check_branch
      %423 = sbr.rel (0) target = $region33
    $region32: #{tpu_custom_call.1} parent=1 // pred_region
      %424 = dma.done [#allocation9], 256
    $region33: #{tpu_custom_call.1} parent=1 // pred_fallthru
      _
    %425 = vsyncpa [#allocation3], 1
    %426 = vsyncpa [#allocation6], 1
    %427 = vsyncpa [#allocation4], 1
    %428 = vsyncpa [#allocation9], 1

</llo_original>
